<compile_context>
chip_gen: v7x
topology: tpu7x:2x2x1
jax: 0.10.0
libtpu: 0.0.40
codegen_flags: <defaults>
</compile_context>

<pallas_src>
import jax
import jax.numpy as jnp
from jax.experimental import pallas as pl
from jax.experimental.pallas import tpu as pltpu


def conv1x1_kernel(x_ref, w_ref, b_ref, o_ref):
    # x_ref: (C_in, tn)   w_ref: (C_out, C_in)   b_ref: (C_out, 1)
    # o_ref: (C_out, tn)
    acc = jnp.dot(w_ref[...], x_ref[...], preferred_element_type=jnp.float32)
    o_ref[...] = acc + b_ref[...]          # w/b already carry the factor 2


def model_forward(x_nchw, weight, bias, *, tn_max=2048):
    """x_nchw: (N, C_in, H, W).  Returns (N, C_out, H+2, W+2) float32.

    Equivalent to:  conv1(x) + conv1(x)  with conv1 = Conv2d(C_in, C_out, 1, padding=1).
    """
    N, C_in, H, W = x_nchw.shape
    C_out = weight.shape[0]
    HW = H * W

    # Fold the "same conv applied twice and summed" factor 2 into the tiny constants.
    w2 = (2.0 * weight.reshape(C_out, C_in)).astype(jnp.float32)   # (C_out, C_in)
    b2 = (2.0 * bias).astype(jnp.float32).reshape(C_out, 1)        # (C_out, 1)

    # Pixel tile: large multiple of 128 lanes; keep >=2 grid steps when possible
    # (v7x dual TensorCore), but never exceed the problem size.
    tn = min(tn_max, pl.cdiv(HW, 128) * 128)
    HW_pad = pl.cdiv(HW, tn) * tn

    # Free reshape: NCHW is already (N, C_in, H*W) contiguous.
    x_flat = x_nchw.reshape(N, C_in, HW).astype(jnp.float32)
    if HW_pad != HW:
        x_flat = jnp.pad(x_flat, ((0, 0), (0, 0), (0, HW_pad - HW)))

    out_flat = pl.pallas_call(
        conv1x1_kernel,
        out_shape=jax.ShapeDtypeStruct((N, C_out, HW_pad), jnp.float32),
        grid_spec=pltpu.PrefetchScalarGridSpec(
            num_scalar_prefetch=0,
            grid=(N, HW_pad // tn),
            in_specs=[
                # batch dim squeezed out of the kernel refs
                pl.BlockSpec((None, C_in, tn), lambda n, j: (n, 0, j)),
                pl.BlockSpec((C_out, C_in), lambda n, j: (0, 0)),
                pl.BlockSpec((C_out, 1), lambda n, j: (0, 0)),
            ],
            out_specs=pl.BlockSpec((None, C_out, tn), lambda n, j: (n, 0, j)),
        ),
        compiler_params=pltpu.CompilerParams(
            dimension_semantics=("parallel", "parallel"),
        ),
    )(x_flat, w2, b2)

    interior = out_flat[:, :, :HW].reshape(N, C_out, H, W)

    # Border pixels of a zero-padded 1x1 conv are exactly 2*bias: fill them on
    # the wrapper side instead of streaming zero rows through the kernel.
    border = jnp.broadcast_to(
        b2.reshape(1, C_out, 1, 1), (N, C_out, H + 2, W + 2)
    )
    out = jax.lax.dynamic_update_slice(border, interior, (0, 0, 1, 1))
    return out


if __name__ == "__main__":
    key = jax.random.PRNGKey(0)
    k_x, k_w, k_b = jax.random.split(key, 3)

    # Shapes consistent with the module spec: x3 = (1, 3, 64, 64), Conv2d(3 -> 64, k=1, pad=1)
    N, C_in, H, W = 1, 3, 64, 64
    C_out = 64

    x = jax.random.normal(k_x, (N, C_in, H, W), dtype=jnp.float32)
    weight = jax.random.normal(k_w, (C_out, C_in, 1, 1), dtype=jnp.float32) * 0.1
    bias = jax.random.normal(k_b, (C_out,), dtype=jnp.float32) * 0.1

    out = model_forward(x, weight, bias)
    out = jax.block_until_ready(out)

    # Reference (same math as the PyTorch forward): 2 * conv1x1_pad1(x)
    x_pad = jnp.pad(x, ((0, 0), (0, 0), (1, 1), (1, 1)))
    ref = jnp.einsum("nchw,oc->nohw", x_pad, weight.reshape(C_out, C_in))
    ref = 2.0 * (ref + bias[None, :, None, None])

    assert out.shape == (N, C_out, H + 2, W + 2), out.shape
    assert jnp.allclose(out, ref, atol=1e-4, rtol=1e-4)

    print("KERNEL_OK")
</pallas_src>

<mosaic_0001>
module attributes {stable_mosaic.version = 11 : i64} {
  func.func @conv1x1_kernel(%arg0: i32, %arg1: i32, %arg2: memref<1x3x2048xf32, #tpu.memory_space<vmem>>, %arg3: memref<64x3xf32, #tpu.memory_space<vmem>>, %arg4: memref<64x1xf32, #tpu.memory_space<vmem>>, %arg5: memref<1x64x2048xf32, #tpu.memory_space<vmem>>) attributes {dimension_semantics = [#tpu.dimension_semantics<parallel>, #tpu.dimension_semantics<parallel>], iteration_bounds = array<i64: 1, 2>, scalar_prefetch = 0 : i64, scratch_operands = 0 : i64, tpu.core_type = #tpu.core_type<tc>, window_params = [{transform_indices = @transform_0, window_bounds = array<i64: 1, 3, 2048>}, {pipeline_mode = #tpu.pipeline_mode<synchronous>, transform_indices = @transform_1, window_bounds = array<i64: 64, 3>}, {pipeline_mode = #tpu.pipeline_mode<synchronous>, transform_indices = @transform_2, window_bounds = array<i64: 64, 1>}, {transform_indices = @transform_3, window_bounds = array<i64: 1, 64, 2048>}]} {
    %c0 = arith.constant 0 : index
    %c0_0 = arith.constant 0 : index
    %0 = vector.load %arg3[%c0, %c0_0] : memref<64x3xf32, #tpu.memory_space<vmem>>, vector<64x3xf32>
    %c0_1 = arith.constant 0 : index
    %c0_2 = arith.constant 0 : index
    %c0_3 = arith.constant 0 : index
    %1 = vector.load %arg2[%c0_1, %c0_2, %c0_3] : memref<1x3x2048xf32, #tpu.memory_space<vmem>>, vector<1x3x2048xf32>
    %2 = vector.shape_cast %1 : vector<1x3x2048xf32> to vector<3x2048xf32>
    %cst = arith.constant dense<0.000000e+00> : vector<64x2048xf32>
    %3 = tpu.matmul %0, %2, %cst {dimension_numbers = #tpu.dot_dimension_numbers<[1], [0], [0], [1], [0, 0, 1, 1], [], []>} : vector<64x3xf32>, vector<3x2048xf32>, vector<64x2048xf32> -> vector<64x2048xf32>
    %c0_4 = arith.constant 0 : index
    %c0_5 = arith.constant 0 : index
    %4 = vector.load %arg4[%c0_4, %c0_5] : memref<64x1xf32, #tpu.memory_space<vmem>>, vector<64x1xf32>
    %5 = vector.broadcast %4 : vector<64x1xf32> to vector<64x2048xf32>
    %6 = arith.addf %3, %5 : vector<64x2048xf32>
    %c0_6 = arith.constant 0 : index
    %c0_7 = arith.constant 0 : index
    %c0_8 = arith.constant 0 : index
    %7 = vector.load %arg5[%c0_6, %c0_7, %c0_8] : memref<1x64x2048xf32, #tpu.memory_space<vmem>>, vector<1x64x2048xf32>
    %8 = vector.shape_cast %7 : vector<1x64x2048xf32> to vector<64x2048xf32>
    %9 = vector.shape_cast %6 : vector<64x2048xf32> to vector<1x64x2048xf32>
    tpu.vector_store %arg5[%c0_6, %c0_7, %c0_8], %9 {strides = array<i32>} : memref<1x64x2048xf32, #tpu.memory_space<vmem>>, vector<1x64x2048xf32>,
    return
  }
  func.func @transform_0(%arg0: i32, %arg1: i32) -> (i32, i32, i32) {
    %c0_i32 = arith.constant 0 : i32
    %c0_i32_0 = arith.constant 0 : i32
    return %arg0, %c0_i32, %arg1 : i32, i32, i32
  }
  func.func @transform_1(%arg0: i32, %arg1: i32) -> (i32, i32) {
    %c0_i32 = arith.constant 0 : i32
    %c0_i32_0 = arith.constant 0 : i32
    %c0_i32_1 = arith.constant 0 : i32
    return %c0_i32, %c0_i32_0 : i32, i32
  }
  func.func @transform_2(%arg0: i32, %arg1: i32) -> (i32, i32) {
    %c0_i32 = arith.constant 0 : i32
    %c0_i32_0 = arith.constant 0 : i32
    %c0_i32_1 = arith.constant 0 : i32
    return %c0_i32, %c0_i32_0 : i32, i32
  }
  func.func @transform_3(%arg0: i32, %arg1: i32) -> (i32, i32, i32) {
    %c0_i32 = arith.constant 0 : i32
    %c0_i32_0 = arith.constant 0 : i32
    return %arg0, %c0_i32, %arg1 : i32, i32, i32
  }
}

</mosaic_0001>

<llo_original>
// kernel: tpu_custom_call.1
$region0: #{tpu_custom_call.1}
  #allocation0 [shape = 'u32[]', space=smem, size = 0x4, offset = 0x4, fixed_abs, tag = 'smem constant byte address 0x4 - core index']
  #allocation1 [shape = 'u32[144,128]{1,0:T(1,128)}', space=vmem, size = 0x12000, scoped, tag = 'internal scratch']
  %s0 = inlined_call_operand.vmem [shape: f32[1,3,4096], index: 0, kind: input, shape index: {}]
  %s1 = inlined_call_operand.vmem [shape: f32[64,3], index: 1, kind: input, shape index: {}]
  %s2 = inlined_call_operand.vmem [shape: f32[64,1], index: 2, kind: input, shape index: {}]
  %s3 = inlined_call_operand.hbm [shape: f32[1,64,4096], index: 3, kind: output, shape index: {}]
  %s4 = sld [smem:[#allocation0]]
  $region45: #{tpu_custom_call.1} parent=0
    _
  %s6 = ssub.s32 1, %s4
  %s7 = scalar_select 0, %s6, %s4
  $region1: #{tpu_custom_call.1} parent=0
    #allocation2 [shape = 'u8[1048576]{0}', space=vmem, size = 0x100000, scoped, tag = 'output window, operand 0']
    #allocation3 [shape = 's32[2]{0}', space=sflag, size = 0x8, scoped, tag = 'scoped memory for tpu_custom_call.1']
    %8 = vsyncpa [#allocation3], 0
    %s9 = scalar_lea.sflag [#allocation3], 1
    %10 = vsyncpa %s9, 0
    loop: start=0, step=1, limit=4
    $region2: #{tpu_custom_call.1} parent=1 // loop_pre_header
      _
    $region3: #{tpu_custom_call.1} parent=1 // loop_header
      %s12 = sphi 0, %s16
      %p13 = scmp.ge.s32.totalorder %s12, 4
      %s19 = sphi 0, %s31
      %s20 = sphi 0, %s27
      %s21 = sphi 0, %s19
      %s22 = sphi 0, %s20
      %s23 = sphi 0, %s21
      %s24 = sphi 0, %s22
      %s36 = sphi 0, %s38
      %s39 = sphi 0, %s36
      %s40 = sphi 0, %s39
      %s56 = sphi 0, %s40
      %s60 = sphi 0, %s60
      %s62 = sphi 0, %s60
      %s63 = sphi 0, %s62
      %s77 = sphi 0, %s63
      %s81 = sphi 0, %s81
      %s83 = sphi 0, %s81
      %s84 = sphi 0, %s83
      %s98 = sphi 0, %s84
      %s106 = sphi 0, %s108
      %s109 = sphi 0, %s106
      %s110 = sphi 0, %s109
      %s126 = sphi 0, %s110
    $region4: #{tpu_custom_call.1} parent=1 // loop_header_branch
      %15 = sbr.rel (%p13) target = $region8
    $region5: #{tpu_custom_call.1} parent=1 // loop_body
      %s17 = ssub.s32 %s12, 1
      %s18 = ssub.s32 %s12, 2
      %s25 = sadd.s32 1, %s20
      %p26 = scmp.ge.s32.totalorder %s25, 2
      %s27 = scalar_select %p26, 0, %s25
      %s28 = sadd.s32 1, %s19
      %s29 = scalar_select %p26, %s28, %s19
      %p30 = scmp.ge.s32.totalorder %s29, 1
      %s31 = scalar_select %p30, 0, %s29
      %s32 = ssub.s32 %s19, %s31
      %s33 = ssub.s32 %s20, %s27
      %s34 = sor.u32 %s32, %s33
      %p35 = scmp.eq.s32.totalorder %s34, 0
      %s37 = sadd.s32 %s36, 1
      %s38 = scalar_select %p35, %s36, %s37
      %p41 = pneg %p35
      %p42 = scmp.eq.s32.totalorder %s12, 1
      %p43 = por %p41, %p42
      %p44 = scmp.ne.s32.totalorder %s36, %s39
      %p45 = scmp.eq.s32.totalorder %s12, 0
      %p46 = por %p44, %p45
      %p47 = scmp.ne.s32.totalorder %s36, %s39
      %p48 = scmp.eq.s32.totalorder %s17, 1
      %p49 = por %p47, %p48
      %p50 = scmp.ne.s32.totalorder %s39, %s40
      %p51 = scmp.eq.s32.totalorder %s17, 0
      %p52 = por %p50, %p51
      %p53 = scmp.ne.s32.totalorder %s39, %s40
      %p54 = scmp.eq.s32.totalorder %s18, 1
      %p55 = por %p53, %p54
      %p57 = scmp.ne.s32.totalorder %s40, %s56
      %p58 = scmp.eq.s32.totalorder %s18, 0
      %p59 = por %p57, %p58
      %s61 = sadd.s32 %s60, 1
      %p64 = scmp.eq.s32.totalorder %s12, 1
      %p65 = scmp.ne.s32.totalorder %s60, %s62
      %p66 = scmp.eq.s32.totalorder %s12, 0
      %p67 = por %p65, %p66
      %p68 = scmp.ne.s32.totalorder %s60, %s62
      %p69 = scmp.eq.s32.totalorder %s17, 1
      %p70 = por %p68, %p69
      %p71 = scmp.ne.s32.totalorder %s62, %s63
      %p72 = scmp.eq.s32.totalorder %s17, 0
      %p73 = por %p71, %p72
      %p74 = scmp.ne.s32.totalorder %s62, %s63
      %p75 = scmp.eq.s32.totalorder %s18, 1
      %p76 = por %p74, %p75
      %p78 = scmp.ne.s32.totalorder %s63, %s77
      %p79 = scmp.eq.s32.totalorder %s18, 0
      %p80 = por %p78, %p79
      %s82 = sadd.s32 %s81, 1
      %p85 = scmp.eq.s32.totalorder %s12, 1
      %p86 = scmp.ne.s32.totalorder %s81, %s83
      %p87 = scmp.eq.s32.totalorder %s12, 0
      %p88 = por %p86, %p87
      %p89 = scmp.ne.s32.totalorder %s81, %s83
      %p90 = scmp.eq.s32.totalorder %s17, 1
      %p91 = por %p89, %p90
      %p92 = scmp.ne.s32.totalorder %s83, %s84
      %p93 = scmp.eq.s32.totalorder %s17, 0
      %p94 = por %p92, %p93
      %p95 = scmp.ne.s32.totalorder %s83, %s84
      %p96 = scmp.eq.s32.totalorder %s18, 1
      %p97 = por %p95, %p96
      %p99 = scmp.ne.s32.totalorder %s84, %s98
      %p100 = scmp.eq.s32.totalorder %s18, 0
      %p101 = por %p99, %p100
      %s102 = ssub.s32 %s19, %s31
      %s103 = ssub.s32 %s20, %s27
      %s104 = sor.u32 %s102, %s103
      %p105 = scmp.eq.s32.totalorder %s104, 0
      %s107 = sadd.s32 %s106, 1
      %s108 = scalar_select %p105, %s106, %s107
      %p111 = pneg %p105
      %p112 = scmp.eq.s32.totalorder %s12, 1
      %p113 = por %p111, %p112
      %p114 = scmp.ne.s32.totalorder %s106, %s109
      %p115 = scmp.eq.s32.totalorder %s12, 0
      %p116 = por %p114, %p115
      %p117 = scmp.ne.s32.totalorder %s106, %s109
      %p118 = scmp.eq.s32.totalorder %s17, 1
      %p119 = por %p117, %p118
      %p120 = scmp.ne.s32.totalorder %s109, %s110
      %p121 = scmp.eq.s32.totalorder %s17, 0
      %p122 = por %p120, %p121
      %p123 = scmp.ne.s32.totalorder %s109, %s110
      %p124 = scmp.eq.s32.totalorder %s18, 1
      %p125 = por %p123, %p124
      %p127 = scmp.ne.s32.totalorder %s110, %s126
      %p128 = scmp.eq.s32.totalorder %s18, 0
      %p129 = por %p127, %p128
      %p130 = scmp.le.s32.totalorder 1, %s12
      %p131 = scmp.lt.s32.totalorder %s12, 3
      %p132 = pnand %p130, %p131
      %p133 = pneg %p132
      // Predicated region
      $region9: #{tpu_custom_call.1} parent=5 // pred_check
        _
      $region10: #{tpu_custom_call.1} parent=5 // pred_check_branch
        %135 = sbr.rel (%p132) target = $region12
      $region11: #{tpu_custom_call.1} parent=5 // pred_region
        %s136 = ssub.s32 %s12, 1
        // Predicated region
        $region13: #{tpu_custom_call.1} parent=11 // pred_check
          %p137 = pneg %p73
        $region14: #{tpu_custom_call.1} parent=11 // pred_check_branch
          %139 = sbr.rel (%p137) target = $region16
        $region15: #{tpu_custom_call.1} parent=11 // pred_region
          _
        $region16: #{tpu_custom_call.1} parent=11 // pred_fallthru
          _
        // Predicated region
        $region17: #{tpu_custom_call.1} parent=11 // pred_check
          %p140 = pneg %p94
        $region18: #{tpu_custom_call.1} parent=11 // pred_check_branch
          %142 = sbr.rel (%p140) target = $region20
        $region19: #{tpu_custom_call.1} parent=11 // pred_region
          _
        $region20: #{tpu_custom_call.1} parent=11 // pred_fallthru
          _
      $region12: #{tpu_custom_call.1} parent=5 // pred_fallthru
        _
      %p143 = scmp.lt.s32.totalorder %s12, 2
      // Predicated region
      $region21: #{tpu_custom_call.1} parent=5 // pred_check
        %p144 = pneg %p143
      $region22: #{tpu_custom_call.1} parent=5 // pred_check_branch
        %146 = sbr.rel (%p144) target = $region24
      $region23: #{tpu_custom_call.1} parent=5 // pred_region
        // Predicated region
        $region25: #{tpu_custom_call.1} parent=23 // pred_check
          %p147 = pneg %p46
        $region26: #{tpu_custom_call.1} parent=23 // pred_check_branch
          %149 = sbr.rel (%p147) target = $region28
        $region27: #{tpu_custom_call.1} parent=23 // pred_region
          %s150 = smul.u32 16, %s20
          %p151 = scmp.lt.s32.totalorder %s19, 0
          %s152 = scalar_select %p151, %s19, 0
          %p153 = scmp.lt.s32.totalorder %s150, 31
          %s154 = scalar_select %p153, %s150, 31
          %s155 = smul.addr %s152, 32
          %s156 = sadd.s32 %s154, %s155
          %s157 = smul.addr %s156, 4
          %s158 = scalar_lea.vmem %s0, %s157
          %s159 = smul.u32 16, %s20
        $region28: #{tpu_custom_call.1} parent=23 // pred_fallthru
          _
      $region24: #{tpu_custom_call.1} parent=5 // pred_fallthru
        _
      %p160 = scmp.le.s32.totalorder 1, %s12
      %p161 = scmp.lt.s32.totalorder %s12, 3
      %p162 = pnand %p160, %p161
      %p163 = pneg %p162
      // Predicated region
      $region29: #{tpu_custom_call.1} parent=5 // pred_check
        _
      $region30: #{tpu_custom_call.1} parent=5 // pred_check_branch
        %165 = sbr.rel (%p162) target = $region32
      $region31: #{tpu_custom_call.1} parent=5 // pred_region
        %s166 = ssub.s32 %s12, 1
        %s167 = smul.u32 16, %s22
        %p168 = scmp.lt.s32.totalorder %s21, 0
        %s169 = scalar_select %p168, %s21, 0
        %p170 = scmp.lt.s32.totalorder %s167, 31
        %s171 = scalar_select %p170, %s167, 31
        %s172 = smul.addr %s169, 32
        %s173 = sadd.s32 %s171, %s172
        %s174 = smul.addr %s173, 4
        %s175 = scalar_lea.vmem %s0, %s174
        %p176 = pneg %p52
        %p177 = pneg %p49
        %p178 = pneg %p73
        %p179 = pneg %p70
        %p180 = pneg %p94
        %p181 = pneg %p91
        %p182 = pneg %p122
        %p183 = pneg %p119
        %s184 = sand.u32 %s109, 1
        %s185 = scalar_lea.sflag [#allocation3], %s184
        %s186 = sand.u32 %s109, 1
        %s187 = smul.addr %s186, 1024
        %s188 = scalar_lea.vmem [#allocation2], %s187
        %s189 = smul.u32 16, %s22
        %p190 = scmp.lt.s32.totalorder %s21, 0
        %s191 = scalar_select %p190, %s21, 0
        %p192 = scmp.lt.s32.totalorder %s189, 31
        %s193 = scalar_select %p192, %s189, 31
        %s194 = smul.addr %s191, 32
        %s195 = sadd.s32 %s193, %s194
        %s196 = smul.addr %s195, 4
        %s197 = scalar_lea.vmem %s0, %s196
        %s198 = smul.u32 16, %s22
        %s199 = smul.u32 16, %s22
        %v200 = vld [vmem:[%s1] sm:$0xff]
        %v201 = vld [vmem:[%s1 + $0x8] sm:$0xff]
        %v202 = vld [vmem:[%s1 + $0x10] sm:$0xff]
        %v203 = vld [vmem:[%s1 + $0x18] sm:$0xff]
        %v204 = vld [vmem:[%s1 + $0x20] sm:$0xff]
        %v205 = vld [vmem:[%s1 + $0x28] sm:$0xff]
        %v206 = vld [vmem:[%s1 + $0x30] sm:$0xff]
        %v207 = vld [vmem:[%s1 + $0x38] sm:$0xff]
        %v208 = vld [vmem:[%s197] sm:$0x77]
        %v209 = vld [vmem:[%s197 + $0x8] sm:$0x77]
        %v210 = vld [vmem:[%s197 + $0x10] sm:$0x77]
        %v211 = vld [vmem:[%s197 + $0x18] sm:$0x77]
        %v212 = vld [vmem:[%s197 + $0x20] sm:$0x77]
        %v213 = vld [vmem:[%s197 + $0x28] sm:$0x77]
        %v214 = vld [vmem:[%s197 + $0x30] sm:$0x77]
        %v215 = vld [vmem:[%s197 + $0x38] sm:$0x77]
        %v216 = vld [vmem:[%s2] sm:$0xff]
        %v217 = vld [vmem:[%s2 + $0x8] sm:$0xff]
        %v218 = vld [vmem:[%s2 + $0x10] sm:$0xff]
        %v219 = vld [vmem:[%s2 + $0x18] sm:$0xff]
        %v220 = vld [vmem:[%s2 + $0x20] sm:$0xff]
        %v221 = vld [vmem:[%s2 + $0x28] sm:$0xff]
        %v222 = vld [vmem:[%s2 + $0x30] sm:$0xff]
        %v223 = vld [vmem:[%s2 + $0x38] sm:$0xff]
        %225 = vset.pattern.permute.xlu0 0
        %226 = vperm.xlu0 %225, %v216
        %v227 = vpop.permute.xlu0 %226
        %230 = vset.pattern.permute.xlu0 0
        %231 = vperm.xlu0 %230, %v217
        %v232 = vpop.permute.xlu0 %231
        %235 = vset.pattern.permute.xlu0 0
        %236 = vperm.xlu0 %235, %v218
        %v237 = vpop.permute.xlu0 %236
        %240 = vset.pattern.permute.xlu0 0
        %241 = vperm.xlu0 %240, %v219
        %v242 = vpop.permute.xlu0 %241
        %245 = vset.pattern.permute.xlu0 0
        %246 = vperm.xlu0 %245, %v220
        %v247 = vpop.permute.xlu0 %246
        %250 = vset.pattern.permute.xlu0 0
        %251 = vperm.xlu0 %250, %v221
        %v252 = vpop.permute.xlu0 %251
        %255 = vset.pattern.permute.xlu0 0
        %256 = vperm.xlu0 %255, %v222
        %v257 = vpop.permute.xlu0 %256
        %260 = vset.pattern.permute.xlu0 0
        %261 = vperm.xlu0 %260, %v223
        %v262 = vpop.permute.xlu0 %261
        %v272 = vcombine.high %v208, %v208
        %v273 = vcombine.high %v209, %v209
        %v274 = vcombine.high %v210, %v210
        %v275 = vcombine.high %v211, %v211
        %v276 = vcombine.high %v212, %v212
        %v277 = vcombine.high %v213, %v213
        %v278 = vcombine.high %v214, %v214
        %v279 = vcombine.high %v215, %v215
        %vm280 = vcmask 23552
        %v282 = vsel %vm280, %v200, 0
        %v285 = vsel %vm280, %v201, 0
        %v288 = vsel %vm280, %v202, 0
        %v291 = vsel %vm280, %v203, 0
        %v294 = vsel %vm280, %v204, 0
        %v297 = vsel %vm280, %v205, 0
        %v300 = vsel %vm280, %v206, 0
        %v303 = vsel %vm280, %v207, 0
        %vm305 = vcmask 1042432
        %v306 = vsel %vm305, %v208, 0
        %v308 = vsel %vm305, %v272, 0
        %v310 = vsel %vm305, %v209, 0
        %v312 = vsel %vm305, %v273, 0
        %v314 = vsel %vm305, %v210, 0
        %v316 = vsel %vm305, %v274, 0
        %v318 = vsel %vm305, %v211, 0
        %v320 = vsel %vm305, %v275, 0
        %v322 = vsel %vm305, %v212, 0
        %v324 = vsel %vm305, %v276, 0
        %v326 = vsel %vm305, %v213, 0
        %v328 = vsel %vm305, %v277, 0
        %v330 = vsel %vm305, %v214, 0
        %v332 = vsel %vm305, %v278, 0
        %v334 = vsel %vm305, %v215, 0
        %v336 = vsel %vm305, %v279, 0
        %338 = vmatprep.subr.mxu0 %v308
        %339 = vmatpush1.msra.mxu0 %v306
        %340 = vmatprep.subr.mxu0 0.0
        %341 = vmatpush1.msra.mxu0 0.0
        %342 = vmatprep.subr.mxu0 0.0
        %343 = vmatpush1.msra.mxu0 0.0
        %344 = vmatprep.subr.mxu0 0.0
        %345 = vmatpush1.msra.mxu0 0.0
        %346 = vmatprep.subr.mxu0 0.0
        %347 = vmatpush1.msra.mxu0 0.0
        %348 = vmatprep.subr.mxu0 0.0
        %349 = vmatpush1.msra.mxu0 0.0
        %350 = vmatprep.subr.mxu0 0.0
        %351 = vmatpush1.msra.mxu0 0.0
        %352 = vmatprep.subr.mxu0 0.0
        %353 = vmatpush1.msra.mxu0 0.0
        %354 = vmatprep.subr.mxu0 0.0
        %355 = vmatpush1.msra.mxu0 0.0
        %356 = vmatprep.subr.mxu0 0.0
        %357 = vmatpush1.msra.mxu0 0.0
        %358 = vmatprep.subr.mxu0 0.0
        %359 = vmatpush1.msra.mxu0 0.0
        %360 = vmatprep.subr.mxu0 0.0
        %361 = vmatpush1.msra.mxu0 0.0
        %362 = vmatprep.subr.mxu0 0.0
        %363 = vmatpush1.msra.mxu0 0.0
        %364 = vmatprep.subr.mxu0 0.0
        %365 = vmatpush1.msra.mxu0 0.0
        %366 = vmatprep.subr.mxu0 0.0
        %367 = vmatpush1.msra.mxu0 0.0
        %368 = vmatprep.subr.mxu0 0.0
        %369 = vmatpush1.msra.mxu0 0.0
        %370 = vmatprep.subr.mxu0 0.0
        %371 = vmatpush1.msra.mxu0 0.0
        %372 = vmatprep.subr.mxu0 0.0
        %373 = vmatpush1.msra.mxu0 0.0
        %374 = vmatprep.subr.mxu0 0.0
        %375 = vmatpush1.msra.mxu0 0.0
        %376 = vmatprep.subr.mxu0 0.0
        %377 = vmatpush1.msra.mxu0 0.0
        %378 = vmatprep.subr.mxu0 0.0
        %379 = vmatpush1.msra.mxu0 0.0
        %380 = vmatprep.subr.mxu0 0.0
        %381 = vmatpush1.msra.mxu0 0.0
        %382 = vmatprep.subr.mxu0 0.0
        %383 = vmatpush1.msra.mxu0 0.0
        %384 = vmatprep.subr.mxu0 0.0
        %385 = vmatpush1.msra.mxu0 0.0
        %386 = vmatprep.subr.mxu0 0.0
        %387 = vmatpush1.msra.mxu0 0.0
        %388 = vmatprep.subr.mxu0 0.0
        %389 = vmatpush1.msra.mxu0 0.0
        %390 = vmatprep.subr.mxu0 0.0
        %391 = vmatpush1.msra.mxu0 0.0
        %392 = vmatprep.subr.mxu0 0.0
        %393 = vmatpush1.msra.mxu0 0.0
        %394 = vmatprep.subr.mxu0 0.0
        %395 = vmatpush1.msra.mxu0 0.0
        %396 = vmatprep.subr.mxu0 0.0
        %397 = vmatpush1.msra.mxu0 0.0
        %398 = vmatprep.subr.mxu0 0.0
        %399 = vmatpush1.msra.mxu0 0.0
        %400 = vmatprep.subr.mxu0 0.0
        %401 = vmatpush1.msra.mxu0 0.0
        %402 = vmatprep.mubr.f32.mxu0 0.0
        %403 = vmatmul.mubr.f32.gmra.mrb[0].mxu0 %v282
        %v404 = vpop.f32.mrb[0].mxu0
        %v405 = vadd.f32 %v227, %v404
        %v406 = vpop.f32.mrb[0].mxu0
        %v407 = vadd.f32 %v227, %v406
        %408 = vmatprep.mubr.f32.mxu0 0.0
        %409 = vmatmul.mubr.f32.gmra.mrb[0].mxu0 %v285
        %v410 = vpop.f32.mrb[0].mxu0
        %v411 = vadd.f32 %v232, %v410
        %v412 = vpop.f32.mrb[0].mxu0
        %v413 = vadd.f32 %v232, %v412
        %414 = vmatprep.mubr.f32.mxu0 0.0
        %415 = vmatmul.mubr.f32.gmra.mrb[0].mxu0 %v288
        %v416 = vpop.f32.mrb[0].mxu0
        %v417 = vadd.f32 %v237, %v416
        %v418 = vpop.f32.mrb[0].mxu0
        %v419 = vadd.f32 %v237, %v418
        %420 = vmatprep.mubr.f32.mxu0 0.0
        %421 = vmatmul.mubr.f32.gmra.mrb[0].mxu0 %v291
        %v422 = vpop.f32.mrb[0].mxu0
        %v423 = vadd.f32 %v242, %v422
        %v424 = vpop.f32.mrb[0].mxu0
        %v425 = vadd.f32 %v242, %v424
        %426 = vmatprep.mubr.f32.mxu0 0.0
        %427 = vmatmul.mubr.f32.gmra.mrb[0].mxu0 %v294
        %v428 = vpop.f32.mrb[0].mxu0
        %v429 = vadd.f32 %v247, %v428
        %v430 = vpop.f32.mrb[0].mxu0
        %v431 = vadd.f32 %v247, %v430
        %432 = vmatprep.mubr.f32.mxu0 0.0
        %433 = vmatmul.mubr.f32.gmra.mrb[0].mxu0 %v297
        %v434 = vpop.f32.mrb[0].mxu0
        %v435 = vadd.f32 %v252, %v434
        %v436 = vpop.f32.mrb[0].mxu0
        %v437 = vadd.f32 %v252, %v436
        %438 = vmatprep.mubr.f32.mxu0 0.0
        %439 = vmatmul.mubr.f32.gmra.mrb[0].mxu0 %v300
        %v440 = vpop.f32.mrb[0].mxu0
        %v441 = vadd.f32 %v257, %v440
        %v442 = vpop.f32.mrb[0].mxu0
        %v443 = vadd.f32 %v257, %v442
        %444 = vmatprep.mubr.f32.mxu0 0.0
        %445 = vmatmul.mubr.f32.gmra.mrb[0].mxu0 %v303
        %v446 = vpop.f32.mrb[0].mxu0
        %v447 = vadd.f32 %v262, %v446
        %v448 = vpop.f32.mrb[0].mxu0
        %v449 = vadd.f32 %v262, %v448
        %450 = vdwg.mxu0
        %451 = vmatprep.subr.mxu0 %v312
        %452 = vmatpush1.msra.mxu0 %v310
        %453 = vmatprep.subr.mxu0 0.0
        %454 = vmatpush1.msra.mxu0 0.0
        %455 = vmatprep.subr.mxu0 0.0
        %456 = vmatpush1.msra.mxu0 0.0
        %457 = vmatprep.subr.mxu0 0.0
        %458 = vmatpush1.msra.mxu0 0.0
        %459 = vmatprep.subr.mxu0 0.0
        %460 = vmatpush1.msra.mxu0 0.0
        %461 = vmatprep.subr.mxu0 0.0
        %462 = vmatpush1.msra.mxu0 0.0
        %463 = vmatprep.subr.mxu0 0.0
        %464 = vmatpush1.msra.mxu0 0.0
        %465 = vmatprep.subr.mxu0 0.0
        %466 = vmatpush1.msra.mxu0 0.0
        %467 = vmatprep.subr.mxu0 0.0
        %468 = vmatpush1.msra.mxu0 0.0
        %469 = vmatprep.subr.mxu0 0.0
        %470 = vmatpush1.msra.mxu0 0.0
        %471 = vmatprep.subr.mxu0 0.0
        %472 = vmatpush1.msra.mxu0 0.0
        %473 = vmatprep.subr.mxu0 0.0
        %474 = vmatpush1.msra.mxu0 0.0
        %475 = vmatprep.subr.mxu0 0.0
        %476 = vmatpush1.msra.mxu0 0.0
        %477 = vmatprep.subr.mxu0 0.0
        %478 = vmatpush1.msra.mxu0 0.0
        %479 = vmatprep.subr.mxu0 0.0
        %480 = vmatpush1.msra.mxu0 0.0
        %481 = vmatprep.subr.mxu0 0.0
        %482 = vmatpush1.msra.mxu0 0.0
        %483 = vmatprep.subr.mxu0 0.0
        %484 = vmatpush1.msra.mxu0 0.0
        %485 = vmatprep.subr.mxu0 0.0
        %486 = vmatpush1.msra.mxu0 0.0
        %487 = vmatprep.subr.mxu0 0.0
        %488 = vmatpush1.msra.mxu0 0.0
        %489 = vmatprep.subr.mxu0 0.0
        %490 = vmatpush1.msra.mxu0 0.0
        %491 = vmatprep.subr.mxu0 0.0
        %492 = vmatpush1.msra.mxu0 0.0
        %493 = vmatprep.subr.mxu0 0.0
        %494 = vmatpush1.msra.mxu0 0.0
        %495 = vmatprep.subr.mxu0 0.0
        %496 = vmatpush1.msra.mxu0 0.0
        %497 = vmatprep.subr.mxu0 0.0
        %498 = vmatpush1.msra.mxu0 0.0
        %499 = vmatprep.subr.mxu0 0.0
        %500 = vmatpush1.msra.mxu0 0.0
        %501 = vmatprep.subr.mxu0 0.0
        %502 = vmatpush1.msra.mxu0 0.0
        %503 = vmatprep.subr.mxu0 0.0
        %504 = vmatpush1.msra.mxu0 0.0
        %505 = vmatprep.subr.mxu0 0.0
        %506 = vmatpush1.msra.mxu0 0.0
        %507 = vmatprep.subr.mxu0 0.0
        %508 = vmatpush1.msra.mxu0 0.0
        %509 = vmatprep.subr.mxu0 0.0
        %510 = vmatpush1.msra.mxu0 0.0
        %511 = vmatprep.subr.mxu0 0.0
        %512 = vmatpush1.msra.mxu0 0.0
        %513 = vmatprep.subr.mxu0 0.0
        %514 = vmatpush1.msra.mxu0 0.0
        %515 = vmatprep.mubr.f32.mxu0 0.0
        %516 = vmatmul.mubr.f32.gmra.mrb[0].mxu0 %v282
        %v517 = vpop.f32.mrb[0].mxu0
        %v518 = vadd.f32 %v227, %v517
        %v519 = vpop.f32.mrb[0].mxu0
        %v520 = vadd.f32 %v227, %v519
        %521 = vmatprep.mubr.f32.mxu0 0.0
        %522 = vmatmul.mubr.f32.gmra.mrb[0].mxu0 %v285
        %v523 = vpop.f32.mrb[0].mxu0
        %v524 = vadd.f32 %v232, %v523
        %v525 = vpop.f32.mrb[0].mxu0
        %v526 = vadd.f32 %v232, %v525
        %527 = vmatprep.mubr.f32.mxu0 0.0
        %528 = vmatmul.mubr.f32.gmra.mrb[0].mxu0 %v288
        %v529 = vpop.f32.mrb[0].mxu0
        %v530 = vadd.f32 %v237, %v529
        %v531 = vpop.f32.mrb[0].mxu0
        %v532 = vadd.f32 %v237, %v531
        %533 = vmatprep.mubr.f32.mxu0 0.0
        %534 = vmatmul.mubr.f32.gmra.mrb[0].mxu0 %v291
        %v535 = vpop.f32.mrb[0].mxu0
        %v536 = vadd.f32 %v242, %v535
        %v537 = vpop.f32.mrb[0].mxu0
        %v538 = vadd.f32 %v242, %v537
        %539 = vmatprep.mubr.f32.mxu0 0.0
        %540 = vmatmul.mubr.f32.gmra.mrb[0].mxu0 %v294
        %v541 = vpop.f32.mrb[0].mxu0
        %v542 = vadd.f32 %v247, %v541
        %v543 = vpop.f32.mrb[0].mxu0
        %v544 = vadd.f32 %v247, %v543
        %545 = vmatprep.mubr.f32.mxu0 0.0
        %546 = vmatmul.mubr.f32.gmra.mrb[0].mxu0 %v297
        %v547 = vpop.f32.mrb[0].mxu0
        %v548 = vadd.f32 %v252, %v547
        %v549 = vpop.f32.mrb[0].mxu0
        %v550 = vadd.f32 %v252, %v549
        %551 = vmatprep.mubr.f32.mxu0 0.0
        %552 = vmatmul.mubr.f32.gmra.mrb[0].mxu0 %v300
        %v553 = vpop.f32.mrb[0].mxu0
        %v554 = vadd.f32 %v257, %v553
        %v555 = vpop.f32.mrb[0].mxu0
        %v556 = vadd.f32 %v257, %v555
        %557 = vmatprep.mubr.f32.mxu0 0.0
        %558 = vmatmul.mubr.f32.gmra.mrb[0].mxu0 %v303
        %v559 = vpop.f32.mrb[0].mxu0
        %v560 = vadd.f32 %v262, %v559
        %v561 = vpop.f32.mrb[0].mxu0
        %v562 = vadd.f32 %v262, %v561
        %563 = vdwg.mxu0
        %564 = vmatprep.subr.mxu0 %v316
        %565 = vmatpush1.msra.mxu0 %v314
        %566 = vmatprep.subr.mxu0 0.0
        %567 = vmatpush1.msra.mxu0 0.0
        %568 = vmatprep.subr.mxu0 0.0
        %569 = vmatpush1.msra.mxu0 0.0
        %570 = vmatprep.subr.mxu0 0.0
        %571 = vmatpush1.msra.mxu0 0.0
        %572 = vmatprep.subr.mxu0 0.0
        %573 = vmatpush1.msra.mxu0 0.0
        %574 = vmatprep.subr.mxu0 0.0
        %575 = vmatpush1.msra.mxu0 0.0
        %576 = vmatprep.subr.mxu0 0.0
        %577 = vmatpush1.msra.mxu0 0.0
        %578 = vmatprep.subr.mxu0 0.0
        %579 = vmatpush1.msra.mxu0 0.0
        %580 = vmatprep.subr.mxu0 0.0
        %581 = vmatpush1.msra.mxu0 0.0
        %582 = vmatprep.subr.mxu0 0.0
        %583 = vmatpush1.msra.mxu0 0.0
        %584 = vmatprep.subr.mxu0 0.0
        %585 = vmatpush1.msra.mxu0 0.0
        %586 = vmatprep.subr.mxu0 0.0
        %587 = vmatpush1.msra.mxu0 0.0
        %588 = vmatprep.subr.mxu0 0.0
        %589 = vmatpush1.msra.mxu0 0.0
        %590 = vmatprep.subr.mxu0 0.0
        %591 = vmatpush1.msra.mxu0 0.0
        %592 = vmatprep.subr.mxu0 0.0
        %593 = vmatpush1.msra.mxu0 0.0
        %594 = vmatprep.subr.mxu0 0.0
        %595 = vmatpush1.msra.mxu0 0.0
        %596 = vmatprep.subr.mxu0 0.0
        %597 = vmatpush1.msra.mxu0 0.0
        %598 = vmatprep.subr.mxu0 0.0
        %599 = vmatpush1.msra.mxu0 0.0
        %600 = vmatprep.subr.mxu0 0.0
        %601 = vmatpush1.msra.mxu0 0.0
        %602 = vmatprep.subr.mxu0 0.0
        %603 = vmatpush1.msra.mxu0 0.0
        %604 = vmatprep.subr.mxu0 0.0
        %605 = vmatpush1.msra.mxu0 0.0
        %606 = vmatprep.subr.mxu0 0.0
        %607 = vmatpush1.msra.mxu0 0.0
        %608 = vmatprep.subr.mxu0 0.0
        %609 = vmatpush1.msra.mxu0 0.0
        %610 = vmatprep.subr.mxu0 0.0
        %611 = vmatpush1.msra.mxu0 0.0
        %612 = vmatprep.subr.mxu0 0.0
        %613 = vmatpush1.msra.mxu0 0.0
        %614 = vmatprep.subr.mxu0 0.0
        %615 = vmatpush1.msra.mxu0 0.0
        %616 = vmatprep.subr.mxu0 0.0
        %617 = vmatpush1.msra.mxu0 0.0
        %618 = vmatprep.subr.mxu0 0.0
        %619 = vmatpush1.msra.mxu0 0.0
        %620 = vmatprep.subr.mxu0 0.0
        %621 = vmatpush1.msra.mxu0 0.0
        %622 = vmatprep.subr.mxu0 0.0
        %623 = vmatpush1.msra.mxu0 0.0
        %624 = vmatprep.subr.mxu0 0.0
        %625 = vmatpush1.msra.mxu0 0.0
        %626 = vmatprep.subr.mxu0 0.0
        %627 = vmatpush1.msra.mxu0 0.0
        %628 = vmatprep.mubr.f32.mxu0 0.0
        %629 = vmatmul.mubr.f32.gmra.mrb[0].mxu0 %v282
        %v630 = vpop.f32.mrb[0].mxu0
        %v631 = vadd.f32 %v227, %v630
        %v632 = vpop.f32.mrb[0].mxu0
        %v633 = vadd.f32 %v227, %v632
        %634 = vmatprep.mubr.f32.mxu0 0.0
        %635 = vmatmul.mubr.f32.gmra.mrb[0].mxu0 %v285
        %v636 = vpop.f32.mrb[0].mxu0
        %v637 = vadd.f32 %v232, %v636
        %v638 = vpop.f32.mrb[0].mxu0
        %v639 = vadd.f32 %v232, %v638
        %640 = vmatprep.mubr.f32.mxu0 0.0
        %641 = vmatmul.mubr.f32.gmra.mrb[0].mxu0 %v288
        %v642 = vpop.f32.mrb[0].mxu0
        %v643 = vadd.f32 %v237, %v642
        %v644 = vpop.f32.mrb[0].mxu0
        %v645 = vadd.f32 %v237, %v644
        %646 = vmatprep.mubr.f32.mxu0 0.0
        %647 = vmatmul.mubr.f32.gmra.mrb[0].mxu0 %v291
        %v648 = vpop.f32.mrb[0].mxu0
        %v649 = vadd.f32 %v242, %v648
        %v650 = vpop.f32.mrb[0].mxu0
        %v651 = vadd.f32 %v242, %v650
        %652 = vmatprep.mubr.f32.mxu0 0.0
        %653 = vmatmul.mubr.f32.gmra.mrb[0].mxu0 %v294
        %v654 = vpop.f32.mrb[0].mxu0
        %v655 = vadd.f32 %v247, %v654
        %v656 = vpop.f32.mrb[0].mxu0
        %v657 = vadd.f32 %v247, %v656
        %658 = vmatprep.mubr.f32.mxu0 0.0
        %659 = vmatmul.mubr.f32.gmra.mrb[0].mxu0 %v297
        %v660 = vpop.f32.mrb[0].mxu0
        %v661 = vadd.f32 %v252, %v660
        %v662 = vpop.f32.mrb[0].mxu0
        %v663 = vadd.f32 %v252, %v662
        %664 = vmatprep.mubr.f32.mxu0 0.0
        %665 = vmatmul.mubr.f32.gmra.mrb[0].mxu0 %v300
        %v666 = vpop.f32.mrb[0].mxu0
        %v667 = vadd.f32 %v257, %v666
        %v668 = vpop.f32.mrb[0].mxu0
        %v669 = vadd.f32 %v257, %v668
        %670 = vmatprep.mubr.f32.mxu0 0.0
        %671 = vmatmul.mubr.f32.gmra.mrb[0].mxu0 %v303
        %v672 = vpop.f32.mrb[0].mxu0
        %v673 = vadd.f32 %v262, %v672
        %v674 = vpop.f32.mrb[0].mxu0
        %v675 = vadd.f32 %v262, %v674
        %676 = vdwg.mxu0
        %677 = vmatprep.subr.mxu0 %v320
        %678 = vmatpush1.msra.mxu0 %v318
        %679 = vmatprep.subr.mxu0 0.0
        %680 = vmatpush1.msra.mxu0 0.0
        %681 = vmatprep.subr.mxu0 0.0
        %682 = vmatpush1.msra.mxu0 0.0
        %683 = vmatprep.subr.mxu0 0.0
        %684 = vmatpush1.msra.mxu0 0.0
        %685 = vmatprep.subr.mxu0 0.0
        %686 = vmatpush1.msra.mxu0 0.0
        %687 = vmatprep.subr.mxu0 0.0
        %688 = vmatpush1.msra.mxu0 0.0
        %689 = vmatprep.subr.mxu0 0.0
        %690 = vmatpush1.msra.mxu0 0.0
        %691 = vmatprep.subr.mxu0 0.0
        %692 = vmatpush1.msra.mxu0 0.0
        %693 = vmatprep.subr.mxu0 0.0
        %694 = vmatpush1.msra.mxu0 0.0
        %695 = vmatprep.subr.mxu0 0.0
        %696 = vmatpush1.msra.mxu0 0.0
        %697 = vmatprep.subr.mxu0 0.0
        %698 = vmatpush1.msra.mxu0 0.0
        %699 = vmatprep.subr.mxu0 0.0
        %700 = vmatpush1.msra.mxu0 0.0
        %701 = vmatprep.subr.mxu0 0.0
        %702 = vmatpush1.msra.mxu0 0.0
        %703 = vmatprep.subr.mxu0 0.0
        %704 = vmatpush1.msra.mxu0 0.0
        %705 = vmatprep.subr.mxu0 0.0
        %706 = vmatpush1.msra.mxu0 0.0
        %707 = vmatprep.subr.mxu0 0.0
        %708 = vmatpush1.msra.mxu0 0.0
        %709 = vmatprep.subr.mxu0 0.0
        %710 = vmatpush1.msra.mxu0 0.0
        %711 = vmatprep.subr.mxu0 0.0
        %712 = vmatpush1.msra.mxu0 0.0
        %713 = vmatprep.subr.mxu0 0.0
        %714 = vmatpush1.msra.mxu0 0.0
        %715 = vmatprep.subr.mxu0 0.0
        %716 = vmatpush1.msra.mxu0 0.0
        %717 = vmatprep.subr.mxu0 0.0
        %718 = vmatpush1.msra.mxu0 0.0
        %719 = vmatprep.subr.mxu0 0.0
        %720 = vmatpush1.msra.mxu0 0.0
        %721 = vmatprep.subr.mxu0 0.0
        %722 = vmatpush1.msra.mxu0 0.0
        %723 = vmatprep.subr.mxu0 0.0
        %724 = vmatpush1.msra.mxu0 0.0
        %725 = vmatprep.subr.mxu0 0.0
        %726 = vmatpush1.msra.mxu0 0.0
        %727 = vmatprep.subr.mxu0 0.0
        %728 = vmatpush1.msra.mxu0 0.0
        %729 = vmatprep.subr.mxu0 0.0
        %730 = vmatpush1.msra.mxu0 0.0
        %731 = vmatprep.subr.mxu0 0.0
        %732 = vmatpush1.msra.mxu0 0.0
        %733 = vmatprep.subr.mxu0 0.0
        %734 = vmatpush1.msra.mxu0 0.0
        %735 = vmatprep.subr.mxu0 0.0
        %736 = vmatpush1.msra.mxu0 0.0
        %737 = vmatprep.subr.mxu0 0.0
        %738 = vmatpush1.msra.mxu0 0.0
        %739 = vmatprep.subr.mxu0 0.0
        %740 = vmatpush1.msra.mxu0 0.0
        %741 = vmatprep.mubr.f32.mxu0 0.0
        %742 = vmatmul.mubr.f32.gmra.mrb[0].mxu0 %v282
        %v743 = vpop.f32.mrb[0].mxu0
        %v744 = vadd.f32 %v227, %v743
        %v745 = vpop.f32.mrb[0].mxu0
        %v746 = vadd.f32 %v227, %v745
        %747 = vmatprep.mubr.f32.mxu0 0.0
        %748 = vmatmul.mubr.f32.gmra.mrb[0].mxu0 %v285
        %v749 = vpop.f32.mrb[0].mxu0
        %v750 = vadd.f32 %v232, %v749
        %v751 = vpop.f32.mrb[0].mxu0
        %v752 = vadd.f32 %v232, %v751
        %753 = vmatprep.mubr.f32.mxu0 0.0
        %754 = vmatmul.mubr.f32.gmra.mrb[0].mxu0 %v288
        %v755 = vpop.f32.mrb[0].mxu0
        %v756 = vadd.f32 %v237, %v755
        %v757 = vpop.f32.mrb[0].mxu0
        %v758 = vadd.f32 %v237, %v757
        %759 = vmatprep.mubr.f32.mxu0 0.0
        %760 = vmatmul.mubr.f32.gmra.mrb[0].mxu0 %v291
        %v761 = vpop.f32.mrb[0].mxu0
        %v762 = vadd.f32 %v242, %v761
        %v763 = vpop.f32.mrb[0].mxu0
        %v764 = vadd.f32 %v242, %v763
        %765 = vmatprep.mubr.f32.mxu0 0.0
        %766 = vmatmul.mubr.f32.gmra.mrb[0].mxu0 %v294
        %v767 = vpop.f32.mrb[0].mxu0
        %v768 = vadd.f32 %v247, %v767
        %v769 = vpop.f32.mrb[0].mxu0
        %v770 = vadd.f32 %v247, %v769
        %771 = vmatprep.mubr.f32.mxu0 0.0
        %772 = vmatmul.mubr.f32.gmra.mrb[0].mxu0 %v297
        %v773 = vpop.f32.mrb[0].mxu0
        %v774 = vadd.f32 %v252, %v773
        %v775 = vpop.f32.mrb[0].mxu0
        %v776 = vadd.f32 %v252, %v775
        %777 = vmatprep.mubr.f32.mxu0 0.0
        %778 = vmatmul.mubr.f32.gmra.mrb[0].mxu0 %v300
        %v779 = vpop.f32.mrb[0].mxu0
        %v780 = vadd.f32 %v257, %v779
        %v781 = vpop.f32.mrb[0].mxu0
        %v782 = vadd.f32 %v257, %v781
        %783 = vmatprep.mubr.f32.mxu0 0.0
        %784 = vmatmul.mubr.f32.gmra.mrb[0].mxu0 %v303
        %v785 = vpop.f32.mrb[0].mxu0
        %v786 = vadd.f32 %v262, %v785
        %v787 = vpop.f32.mrb[0].mxu0
        %v788 = vadd.f32 %v262, %v787
        %789 = vdwg.mxu0
        %790 = vmatprep.subr.mxu0 %v324
        %791 = vmatpush1.msra.mxu0 %v322
        %792 = vmatprep.subr.mxu0 0.0
        %793 = vmatpush1.msra.mxu0 0.0
        %794 = vmatprep.subr.mxu0 0.0
        %795 = vmatpush1.msra.mxu0 0.0
        %796 = vmatprep.subr.mxu0 0.0
        %797 = vmatpush1.msra.mxu0 0.0
        %798 = vmatprep.subr.mxu0 0.0
        %799 = vmatpush1.msra.mxu0 0.0
        %800 = vmatprep.subr.mxu0 0.0
        %801 = vmatpush1.msra.mxu0 0.0
        %802 = vmatprep.subr.mxu0 0.0
        %803 = vmatpush1.msra.mxu0 0.0
        %804 = vmatprep.subr.mxu0 0.0
        %805 = vmatpush1.msra.mxu0 0.0
        %806 = vmatprep.subr.mxu0 0.0
        %807 = vmatpush1.msra.mxu0 0.0
        %808 = vmatprep.subr.mxu0 0.0
        %809 = vmatpush1.msra.mxu0 0.0
        %810 = vmatprep.subr.mxu0 0.0
        %811 = vmatpush1.msra.mxu0 0.0
        %812 = vmatprep.subr.mxu0 0.0
        %813 = vmatpush1.msra.mxu0 0.0
        %814 = vmatprep.subr.mxu0 0.0
        %815 = vmatpush1.msra.mxu0 0.0
        %816 = vmatprep.subr.mxu0 0.0
        %817 = vmatpush1.msra.mxu0 0.0
        %818 = vmatprep.subr.mxu0 0.0
        %819 = vmatpush1.msra.mxu0 0.0
        %820 = vmatprep.subr.mxu0 0.0
        %821 = vmatpush1.msra.mxu0 0.0
        %822 = vmatprep.subr.mxu0 0.0
        %823 = vmatpush1.msra.mxu0 0.0
        %824 = vmatprep.subr.mxu0 0.0
        %825 = vmatpush1.msra.mxu0 0.0
        %826 = vmatprep.subr.mxu0 0.0
        %827 = vmatpush1.msra.mxu0 0.0
        %828 = vmatprep.subr.mxu0 0.0
        %829 = vmatpush1.msra.mxu0 0.0
        %830 = vmatprep.subr.mxu0 0.0
        %831 = vmatpush1.msra.mxu0 0.0
        %832 = vmatprep.subr.mxu0 0.0
        %833 = vmatpush1.msra.mxu0 0.0
        %834 = vmatprep.subr.mxu0 0.0
        %835 = vmatpush1.msra.mxu0 0.0
        %836 = vmatprep.subr.mxu0 0.0
        %837 = vmatpush1.msra.mxu0 0.0
        %838 = vmatprep.subr.mxu0 0.0
        %839 = vmatpush1.msra.mxu0 0.0
        %840 = vmatprep.subr.mxu0 0.0
        %841 = vmatpush1.msra.mxu0 0.0
        %842 = vmatprep.subr.mxu0 0.0
        %843 = vmatpush1.msra.mxu0 0.0
        %844 = vmatprep.subr.mxu0 0.0
        %845 = vmatpush1.msra.mxu0 0.0
        %846 = vmatprep.subr.mxu0 0.0
        %847 = vmatpush1.msra.mxu0 0.0
        %848 = vmatprep.subr.mxu0 0.0
        %849 = vmatpush1.msra.mxu0 0.0
        %850 = vmatprep.subr.mxu0 0.0
        %851 = vmatpush1.msra.mxu0 0.0
        %852 = vmatprep.subr.mxu0 0.0
        %853 = vmatpush1.msra.mxu0 0.0
        %854 = vmatprep.mubr.f32.mxu0 0.0
        %855 = vmatmul.mubr.f32.gmra.mrb[0].mxu0 %v282
        %v856 = vpop.f32.mrb[0].mxu0
        %v857 = vadd.f32 %v227, %v856
        %v858 = vpop.f32.mrb[0].mxu0
        %v859 = vadd.f32 %v227, %v858
        %860 = vmatprep.mubr.f32.mxu0 0.0
        %861 = vmatmul.mubr.f32.gmra.mrb[0].mxu0 %v285
        %v862 = vpop.f32.mrb[0].mxu0
        %v863 = vadd.f32 %v232, %v862
        %v864 = vpop.f32.mrb[0].mxu0
        %v865 = vadd.f32 %v232, %v864
        %866 = vmatprep.mubr.f32.mxu0 0.0
        %867 = vmatmul.mubr.f32.gmra.mrb[0].mxu0 %v288
        %v868 = vpop.f32.mrb[0].mxu0
        %v869 = vadd.f32 %v237, %v868
        %v870 = vpop.f32.mrb[0].mxu0
        %v871 = vadd.f32 %v237, %v870
        %872 = vmatprep.mubr.f32.mxu0 0.0
        %873 = vmatmul.mubr.f32.gmra.mrb[0].mxu0 %v291
        %v874 = vpop.f32.mrb[0].mxu0
        %v875 = vadd.f32 %v242, %v874
        %v876 = vpop.f32.mrb[0].mxu0
        %v877 = vadd.f32 %v242, %v876
        %878 = vmatprep.mubr.f32.mxu0 0.0
        %879 = vmatmul.mubr.f32.gmra.mrb[0].mxu0 %v294
        %v880 = vpop.f32.mrb[0].mxu0
        %v881 = vadd.f32 %v247, %v880
        %v882 = vpop.f32.mrb[0].mxu0
        %v883 = vadd.f32 %v247, %v882
        %884 = vmatprep.mubr.f32.mxu0 0.0
        %885 = vmatmul.mubr.f32.gmra.mrb[0].mxu0 %v297
        %v886 = vpop.f32.mrb[0].mxu0
        %v887 = vadd.f32 %v252, %v886
        %v888 = vpop.f32.mrb[0].mxu0
        %v889 = vadd.f32 %v252, %v888
        %890 = vmatprep.mubr.f32.mxu0 0.0
        %891 = vmatmul.mubr.f32.gmra.mrb[0].mxu0 %v300
        %v892 = vpop.f32.mrb[0].mxu0
        %v893 = vadd.f32 %v257, %v892
        %v894 = vpop.f32.mrb[0].mxu0
        %v895 = vadd.f32 %v257, %v894
        %896 = vmatprep.mubr.f32.mxu0 0.0
        %897 = vmatmul.mubr.f32.gmra.mrb[0].mxu0 %v303
        %v898 = vpop.f32.mrb[0].mxu0
        %v899 = vadd.f32 %v262, %v898
        %v900 = vpop.f32.mrb[0].mxu0
        %v901 = vadd.f32 %v262, %v900
        %902 = vdwg.mxu0
        %903 = vmatprep.subr.mxu0 %v328
        %904 = vmatpush1.msra.mxu0 %v326
        %905 = vmatprep.subr.mxu0 0.0
        %906 = vmatpush1.msra.mxu0 0.0
        %907 = vmatprep.subr.mxu0 0.0
        %908 = vmatpush1.msra.mxu0 0.0
        %909 = vmatprep.subr.mxu0 0.0
        %910 = vmatpush1.msra.mxu0 0.0
        %911 = vmatprep.subr.mxu0 0.0
        %912 = vmatpush1.msra.mxu0 0.0
        %913 = vmatprep.subr.mxu0 0.0
        %914 = vmatpush1.msra.mxu0 0.0
        %915 = vmatprep.subr.mxu0 0.0
        %916 = vmatpush1.msra.mxu0 0.0
        %917 = vmatprep.subr.mxu0 0.0
        %918 = vmatpush1.msra.mxu0 0.0
        %919 = vmatprep.subr.mxu0 0.0
        %920 = vmatpush1.msra.mxu0 0.0
        %921 = vmatprep.subr.mxu0 0.0
        %922 = vmatpush1.msra.mxu0 0.0
        %923 = vmatprep.subr.mxu0 0.0
        %924 = vmatpush1.msra.mxu0 0.0
        %925 = vmatprep.subr.mxu0 0.0
        %926 = vmatpush1.msra.mxu0 0.0
        %927 = vmatprep.subr.mxu0 0.0
        %928 = vmatpush1.msra.mxu0 0.0
        %929 = vmatprep.subr.mxu0 0.0
        %930 = vmatpush1.msra.mxu0 0.0
        %931 = vmatprep.subr.mxu0 0.0
        %932 = vmatpush1.msra.mxu0 0.0
        %933 = vmatprep.subr.mxu0 0.0
        %934 = vmatpush1.msra.mxu0 0.0
        %935 = vmatprep.subr.mxu0 0.0
        %936 = vmatpush1.msra.mxu0 0.0
        %937 = vmatprep.subr.mxu0 0.0
        %938 = vmatpush1.msra.mxu0 0.0
        %939 = vmatprep.subr.mxu0 0.0
        %940 = vmatpush1.msra.mxu0 0.0
        %941 = vmatprep.subr.mxu0 0.0
        %942 = vmatpush1.msra.mxu0 0.0
        %943 = vmatprep.subr.mxu0 0.0
        %944 = vmatpush1.msra.mxu0 0.0
        %945 = vmatprep.subr.mxu0 0.0
        %946 = vmatpush1.msra.mxu0 0.0
        %947 = vmatprep.subr.mxu0 0.0
        %948 = vmatpush1.msra.mxu0 0.0
        %949 = vmatprep.subr.mxu0 0.0
        %950 = vmatpush1.msra.mxu0 0.0
        %951 = vmatprep.subr.mxu0 0.0
        %952 = vmatpush1.msra.mxu0 0.0
        %953 = vmatprep.subr.mxu0 0.0
        %954 = vmatpush1.msra.mxu0 0.0
        %955 = vmatprep.subr.mxu0 0.0
        %956 = vmatpush1.msra.mxu0 0.0
        %957 = vmatprep.subr.mxu0 0.0
        %958 = vmatpush1.msra.mxu0 0.0
        %959 = vmatprep.subr.mxu0 0.0
        %960 = vmatpush1.msra.mxu0 0.0
        %961 = vmatprep.subr.mxu0 0.0
        %962 = vmatpush1.msra.mxu0 0.0
        %963 = vmatprep.subr.mxu0 0.0
        %964 = vmatpush1.msra.mxu0 0.0
        %965 = vmatprep.subr.mxu0 0.0
        %966 = vmatpush1.msra.mxu0 0.0
        %967 = vmatprep.mubr.f32.mxu0 0.0
        %968 = vmatmul.mubr.f32.gmra.mrb[0].mxu0 %v282
        %v969 = vpop.f32.mrb[0].mxu0
        %v970 = vadd.f32 %v227, %v969
        %v971 = vpop.f32.mrb[0].mxu0
        %v972 = vadd.f32 %v227, %v971
        %973 = vmatprep.mubr.f32.mxu0 0.0
        %974 = vmatmul.mubr.f32.gmra.mrb[0].mxu0 %v285
        %v975 = vpop.f32.mrb[0].mxu0
        %v976 = vadd.f32 %v232, %v975
        %v977 = vpop.f32.mrb[0].mxu0
        %v978 = vadd.f32 %v232, %v977
        %979 = vmatprep.mubr.f32.mxu0 0.0
        %980 = vmatmul.mubr.f32.gmra.mrb[0].mxu0 %v288
        %v981 = vpop.f32.mrb[0].mxu0
        %v982 = vadd.f32 %v237, %v981
        %v983 = vpop.f32.mrb[0].mxu0
        %v984 = vadd.f32 %v237, %v983
        %985 = vmatprep.mubr.f32.mxu0 0.0
        %986 = vmatmul.mubr.f32.gmra.mrb[0].mxu0 %v291
        %v987 = vpop.f32.mrb[0].mxu0
        %v988 = vadd.f32 %v242, %v987
        %v989 = vpop.f32.mrb[0].mxu0
        %v990 = vadd.f32 %v242, %v989
        %991 = vmatprep.mubr.f32.mxu0 0.0
        %992 = vmatmul.mubr.f32.gmra.mrb[0].mxu0 %v294
        %v993 = vpop.f32.mrb[0].mxu0
        %v994 = vadd.f32 %v247, %v993
        %v995 = vpop.f32.mrb[0].mxu0
        %v996 = vadd.f32 %v247, %v995
        %997 = vmatprep.mubr.f32.mxu0 0.0
        %998 = vmatmul.mubr.f32.gmra.mrb[0].mxu0 %v297
        %v999 = vpop.f32.mrb[0].mxu0
        %v1000 = vadd.f32 %v252, %v999
        %v1001 = vpop.f32.mrb[0].mxu0
        %v1002 = vadd.f32 %v252, %v1001
        %1003 = vmatprep.mubr.f32.mxu0 0.0
        %1004 = vmatmul.mubr.f32.gmra.mrb[0].mxu0 %v300
        %v1005 = vpop.f32.mrb[0].mxu0
        %v1006 = vadd.f32 %v257, %v1005
        %v1007 = vpop.f32.mrb[0].mxu0
        %v1008 = vadd.f32 %v257, %v1007
        %1009 = vmatprep.mubr.f32.mxu0 0.0
        %1010 = vmatmul.mubr.f32.gmra.mrb[0].mxu0 %v303
        %v1011 = vpop.f32.mrb[0].mxu0
        %v1012 = vadd.f32 %v262, %v1011
        %v1013 = vpop.f32.mrb[0].mxu0
        %v1014 = vadd.f32 %v262, %v1013
        %1015 = vdwg.mxu0
        %1016 = vmatprep.subr.mxu0 %v332
        %1017 = vmatpush1.msra.mxu0 %v330
        %1018 = vmatprep.subr.mxu0 0.0
        %1019 = vmatpush1.msra.mxu0 0.0
        %1020 = vmatprep.subr.mxu0 0.0
        %1021 = vmatpush1.msra.mxu0 0.0
        %1022 = vmatprep.subr.mxu0 0.0
        %1023 = vmatpush1.msra.mxu0 0.0
        %1024 = vmatprep.subr.mxu0 0.0
        %1025 = vmatpush1.msra.mxu0 0.0
        %1026 = vmatprep.subr.mxu0 0.0
        %1027 = vmatpush1.msra.mxu0 0.0
        %1028 = vmatprep.subr.mxu0 0.0
        %1029 = vmatpush1.msra.mxu0 0.0
        %1030 = vmatprep.subr.mxu0 0.0
        %1031 = vmatpush1.msra.mxu0 0.0
        %1032 = vmatprep.subr.mxu0 0.0
        %1033 = vmatpush1.msra.mxu0 0.0
        %1034 = vmatprep.subr.mxu0 0.0
        %1035 = vmatpush1.msra.mxu0 0.0
        %1036 = vmatprep.subr.mxu0 0.0
        %1037 = vmatpush1.msra.mxu0 0.0
        %1038 = vmatprep.subr.mxu0 0.0
        %1039 = vmatpush1.msra.mxu0 0.0
        %1040 = vmatprep.subr.mxu0 0.0
        %1041 = vmatpush1.msra.mxu0 0.0
        %1042 = vmatprep.subr.mxu0 0.0
        %1043 = vmatpush1.msra.mxu0 0.0
        %1044 = vmatprep.subr.mxu0 0.0
        %1045 = vmatpush1.msra.mxu0 0.0
        %1046 = vmatprep.subr.mxu0 0.0
        %1047 = vmatpush1.msra.mxu0 0.0
        %1048 = vmatprep.subr.mxu0 0.0
        %1049 = vmatpush1.msra.mxu0 0.0
        %1050 = vmatprep.subr.mxu0 0.0
        %1051 = vmatpush1.msra.mxu0 0.0
        %1052 = vmatprep.subr.mxu0 0.0
        %1053 = vmatpush1.msra.mxu0 0.0
        %1054 = vmatprep.subr.mxu0 0.0
        %1055 = vmatpush1.msra.mxu0 0.0
        %1056 = vmatprep.subr.mxu0 0.0
        %1057 = vmatpush1.msra.mxu0 0.0
        %1058 = vmatprep.subr.mxu0 0.0
        %1059 = vmatpush1.msra.mxu0 0.0
        %1060 = vmatprep.subr.mxu0 0.0
        %1061 = vmatpush1.msra.mxu0 0.0
        %1062 = vmatprep.subr.mxu0 0.0
        %1063 = vmatpush1.msra.mxu0 0.0
        %1064 = vmatprep.subr.mxu0 0.0
        %1065 = vmatpush1.msra.mxu0 0.0
        %1066 = vmatprep.subr.mxu0 0.0
        %1067 = vmatpush1.msra.mxu0 0.0
        %1068 = vmatprep.subr.mxu0 0.0
        %1069 = vmatpush1.msra.mxu0 0.0
        %1070 = vmatprep.subr.mxu0 0.0
        %1071 = vmatpush1.msra.mxu0 0.0
        %1072 = vmatprep.subr.mxu0 0.0
        %1073 = vmatpush1.msra.mxu0 0.0
        %1074 = vmatprep.subr.mxu0 0.0
        %1075 = vmatpush1.msra.mxu0 0.0
        %1076 = vmatprep.subr.mxu0 0.0
        %1077 = vmatpush1.msra.mxu0 0.0
        %1078 = vmatprep.subr.mxu0 0.0
        %1079 = vmatpush1.msra.mxu0 0.0
        %1080 = vmatprep.mubr.f32.mxu0 0.0
        %1081 = vmatmul.mubr.f32.gmra.mrb[0].mxu0 %v282
        %v1082 = vpop.f32.mrb[0].mxu0
        %v1083 = vadd.f32 %v227, %v1082
        %v1084 = vpop.f32.mrb[0].mxu0
        %v1085 = vadd.f32 %v227, %v1084
        %1086 = vmatprep.mubr.f32.mxu0 0.0
        %1087 = vmatmul.mubr.f32.gmra.mrb[0].mxu0 %v285
        %v1088 = vpop.f32.mrb[0].mxu0
        %v1089 = vadd.f32 %v232, %v1088
        %v1090 = vpop.f32.mrb[0].mxu0
        %v1091 = vadd.f32 %v232, %v1090
        %1092 = vmatprep.mubr.f32.mxu0 0.0
        %1093 = vmatmul.mubr.f32.gmra.mrb[0].mxu0 %v288
        %v1094 = vpop.f32.mrb[0].mxu0
        %v1095 = vadd.f32 %v237, %v1094
        %v1096 = vpop.f32.mrb[0].mxu0
        %v1097 = vadd.f32 %v237, %v1096
        %1098 = vmatprep.mubr.f32.mxu0 0.0
        %1099 = vmatmul.mubr.f32.gmra.mrb[0].mxu0 %v291
        %v1100 = vpop.f32.mrb[0].mxu0
        %v1101 = vadd.f32 %v242, %v1100
        %v1102 = vpop.f32.mrb[0].mxu0
        %v1103 = vadd.f32 %v242, %v1102
        %1104 = vmatprep.mubr.f32.mxu0 0.0
        %1105 = vmatmul.mubr.f32.gmra.mrb[0].mxu0 %v294
        %v1106 = vpop.f32.mrb[0].mxu0
        %v1107 = vadd.f32 %v247, %v1106
        %v1108 = vpop.f32.mrb[0].mxu0
        %v1109 = vadd.f32 %v247, %v1108
        %1110 = vmatprep.mubr.f32.mxu0 0.0
        %1111 = vmatmul.mubr.f32.gmra.mrb[0].mxu0 %v297
        %v1112 = vpop.f32.mrb[0].mxu0
        %v1113 = vadd.f32 %v252, %v1112
        %v1114 = vpop.f32.mrb[0].mxu0
        %v1115 = vadd.f32 %v252, %v1114
        %1116 = vmatprep.mubr.f32.mxu0 0.0
        %1117 = vmatmul.mubr.f32.gmra.mrb[0].mxu0 %v300
        %v1118 = vpop.f32.mrb[0].mxu0
        %v1119 = vadd.f32 %v257, %v1118
        %v1120 = vpop.f32.mrb[0].mxu0
        %v1121 = vadd.f32 %v257, %v1120
        %1122 = vmatprep.mubr.f32.mxu0 0.0
        %1123 = vmatmul.mubr.f32.gmra.mrb[0].mxu0 %v303
        %v1124 = vpop.f32.mrb[0].mxu0
        %v1125 = vadd.f32 %v262, %v1124
        %v1126 = vpop.f32.mrb[0].mxu0
        %v1127 = vadd.f32 %v262, %v1126
        %1128 = vdwg.mxu0
        %1129 = vmatprep.subr.mxu0 %v336
        %1130 = vmatpush1.msra.mxu0 %v334
        %1131 = vmatprep.subr.mxu0 0.0
        %1132 = vmatpush1.msra.mxu0 0.0
        %1133 = vmatprep.subr.mxu0 0.0
        %1134 = vmatpush1.msra.mxu0 0.0
        %1135 = vmatprep.subr.mxu0 0.0
        %1136 = vmatpush1.msra.mxu0 0.0
        %1137 = vmatprep.subr.mxu0 0.0
        %1138 = vmatpush1.msra.mxu0 0.0
        %1139 = vmatprep.subr.mxu0 0.0
        %1140 = vmatpush1.msra.mxu0 0.0
        %1141 = vmatprep.subr.mxu0 0.0
        %1142 = vmatpush1.msra.mxu0 0.0
        %1143 = vmatprep.subr.mxu0 0.0
        %1144 = vmatpush1.msra.mxu0 0.0
        %1145 = vmatprep.subr.mxu0 0.0
        %1146 = vmatpush1.msra.mxu0 0.0
        %1147 = vmatprep.subr.mxu0 0.0
        %1148 = vmatpush1.msra.mxu0 0.0
        %1149 = vmatprep.subr.mxu0 0.0
        %1150 = vmatpush1.msra.mxu0 0.0
        %1151 = vmatprep.subr.mxu0 0.0
        %1152 = vmatpush1.msra.mxu0 0.0
        %1153 = vmatprep.subr.mxu0 0.0
        %1154 = vmatpush1.msra.mxu0 0.0
        %1155 = vmatprep.subr.mxu0 0.0
        %1156 = vmatpush1.msra.mxu0 0.0
        %1157 = vmatprep.subr.mxu0 0.0
        %1158 = vmatpush1.msra.mxu0 0.0
        %1159 = vmatprep.subr.mxu0 0.0
        %1160 = vmatpush1.msra.mxu0 0.0
        %1161 = vmatprep.subr.mxu0 0.0
        %1162 = vmatpush1.msra.mxu0 0.0
        %1163 = vmatprep.subr.mxu0 0.0
        %1164 = vmatpush1.msra.mxu0 0.0
        %1165 = vmatprep.subr.mxu0 0.0
        %1166 = vmatpush1.msra.mxu0 0.0
        %1167 = vmatprep.subr.mxu0 0.0
        %1168 = vmatpush1.msra.mxu0 0.0
        %1169 = vmatprep.subr.mxu0 0.0
        %1170 = vmatpush1.msra.mxu0 0.0
        %1171 = vmatprep.subr.mxu0 0.0
        %1172 = vmatpush1.msra.mxu0 0.0
        %1173 = vmatprep.subr.mxu0 0.0
        %1174 = vmatpush1.msra.mxu0 0.0
        %1175 = vmatprep.subr.mxu0 0.0
        %1176 = vmatpush1.msra.mxu0 0.0
        %1177 = vmatprep.subr.mxu0 0.0
        %1178 = vmatpush1.msra.mxu0 0.0
        %1179 = vmatprep.subr.mxu0 0.0
        %1180 = vmatpush1.msra.mxu0 0.0
        %1181 = vmatprep.subr.mxu0 0.0
        %1182 = vmatpush1.msra.mxu0 0.0
        %1183 = vmatprep.subr.mxu0 0.0
        %1184 = vmatpush1.msra.mxu0 0.0
        %1185 = vmatprep.subr.mxu0 0.0
        %1186 = vmatpush1.msra.mxu0 0.0
        %1187 = vmatprep.subr.mxu0 0.0
        %1188 = vmatpush1.msra.mxu0 0.0
        %1189 = vmatprep.subr.mxu0 0.0
        %1190 = vmatpush1.msra.mxu0 0.0
        %1191 = vmatprep.subr.mxu0 0.0
        %1192 = vmatpush1.msra.mxu0 0.0
        %1193 = vmatprep.mubr.f32.mxu0 0.0
        %1194 = vmatmul.mubr.f32.gmra.mrb[0].mxu0 %v282
        %v1195 = vpop.f32.mrb[0].mxu0
        %v1196 = vadd.f32 %v227, %v1195
        %v1197 = vpop.f32.mrb[0].mxu0
        %v1198 = vadd.f32 %v227, %v1197
        %1199 = vmatprep.mubr.f32.mxu0 0.0
        %1200 = vmatmul.mubr.f32.gmra.mrb[0].mxu0 %v285
        %v1201 = vpop.f32.mrb[0].mxu0
        %v1202 = vadd.f32 %v232, %v1201
        %v1203 = vpop.f32.mrb[0].mxu0
        %v1204 = vadd.f32 %v232, %v1203
        %1205 = vmatprep.mubr.f32.mxu0 0.0
        %1206 = vmatmul.mubr.f32.gmra.mrb[0].mxu0 %v288
        %v1207 = vpop.f32.mrb[0].mxu0
        %v1208 = vadd.f32 %v237, %v1207
        %v1209 = vpop.f32.mrb[0].mxu0
        %v1210 = vadd.f32 %v237, %v1209
        %1211 = vmatprep.mubr.f32.mxu0 0.0
        %1212 = vmatmul.mubr.f32.gmra.mrb[0].mxu0 %v291
        %v1213 = vpop.f32.mrb[0].mxu0
        %v1214 = vadd.f32 %v242, %v1213
        %v1215 = vpop.f32.mrb[0].mxu0
        %v1216 = vadd.f32 %v242, %v1215
        %1217 = vmatprep.mubr.f32.mxu0 0.0
        %1218 = vmatmul.mubr.f32.gmra.mrb[0].mxu0 %v294
        %v1219 = vpop.f32.mrb[0].mxu0
        %v1220 = vadd.f32 %v247, %v1219
        %v1221 = vpop.f32.mrb[0].mxu0
        %v1222 = vadd.f32 %v247, %v1221
        %1223 = vmatprep.mubr.f32.mxu0 0.0
        %1224 = vmatmul.mubr.f32.gmra.mrb[0].mxu0 %v297
        %v1225 = vpop.f32.mrb[0].mxu0
        %v1226 = vadd.f32 %v252, %v1225
        %v1227 = vpop.f32.mrb[0].mxu0
        %v1228 = vadd.f32 %v252, %v1227
        %1229 = vmatprep.mubr.f32.mxu0 0.0
        %1230 = vmatmul.mubr.f32.gmra.mrb[0].mxu0 %v300
        %v1231 = vpop.f32.mrb[0].mxu0
        %v1232 = vadd.f32 %v257, %v1231
        %v1233 = vpop.f32.mrb[0].mxu0
        %v1234 = vadd.f32 %v257, %v1233
        %1235 = vmatprep.mubr.f32.mxu0 0.0
        %1236 = vmatmul.mubr.f32.gmra.mrb[0].mxu0 %v303
        %v1237 = vpop.f32.mrb[0].mxu0
        %v1238 = vadd.f32 %v262, %v1237
        %v1239 = vpop.f32.mrb[0].mxu0
        %v1240 = vadd.f32 %v262, %v1239
        %1241 = vdwg.mxu0
        %1242 = vst [vmem:[%s188] sm:$0xff] %v405
        %1243 = vst [vmem:[%s188 + $0x8] sm:$0xff] %v407
        %1244 = vst [vmem:[%s188 + $0x10] sm:$0xff] %v518
        %1245 = vst [vmem:[%s188 + $0x18] sm:$0xff] %v520
        %1246 = vst [vmem:[%s188 + $0x20] sm:$0xff] %v631
        %1247 = vst [vmem:[%s188 + $0x28] sm:$0xff] %v633
        %1248 = vst [vmem:[%s188 + $0x30] sm:$0xff] %v744
        %1249 = vst [vmem:[%s188 + $0x38] sm:$0xff] %v746
        %1250 = vst [vmem:[%s188 + $0x40] sm:$0xff] %v857
        %1251 = vst [vmem:[%s188 + $0x48] sm:$0xff] %v859
        %1252 = vst [vmem:[%s188 + $0x50] sm:$0xff] %v970
        %1253 = vst [vmem:[%s188 + $0x58] sm:$0xff] %v972
        %1254 = vst [vmem:[%s188 + $0x60] sm:$0xff] %v1083
        %1255 = vst [vmem:[%s188 + $0x68] sm:$0xff] %v1085
        %1256 = vst [vmem:[%s188 + $0x70] sm:$0xff] %v1196
        %1257 = vst [vmem:[%s188 + $0x78] sm:$0xff] %v1198
        %1258 = vst [vmem:[%s188 + $0x80] sm:$0xff] %v411
        %1259 = vst [vmem:[%s188 + $0x88] sm:$0xff] %v413
        %1260 = vst [vmem:[%s188 + $0x90] sm:$0xff] %v524
        %1261 = vst [vmem:[%s188 + $0x98] sm:$0xff] %v526
        %1262 = vst [vmem:[%s188 + $0xa0] sm:$0xff] %v637
        %1263 = vst [vmem:[%s188 + $0xa8] sm:$0xff] %v639
        %1264 = vst [vmem:[%s188 + $0xb0] sm:$0xff] %v750
        %1265 = vst [vmem:[%s188 + $0xb8] sm:$0xff] %v752
        %1266 = vst [vmem:[%s188 + $0xc0] sm:$0xff] %v863
        %1267 = vst [vmem:[%s188 + $0xc8] sm:$0xff] %v865
        %1268 = vst [vmem:[%s188 + $0xd0] sm:$0xff] %v976
        %1269 = vst [vmem:[%s188 + $0xd8] sm:$0xff] %v978
        %1270 = vst [vmem:[%s188 + $0xe0] sm:$0xff] %v1089
        %1271 = vst [vmem:[%s188 + $0xe8] sm:$0xff] %v1091
        %1272 = vst [vmem:[%s188 + $0xf0] sm:$0xff] %v1202
        %1273 = vst [vmem:[%s188 + $0xf8] sm:$0xff] %v1204
        %1274 = vst [vmem:[%s188 + $0x100] sm:$0xff] %v417
        %1275 = vst [vmem:[%s188 + $0x108] sm:$0xff] %v419
        %1276 = vst [vmem:[%s188 + $0x110] sm:$0xff] %v530
        %1277 = vst [vmem:[%s188 + $0x118] sm:$0xff] %v532
        %1278 = vst [vmem:[%s188 + $0x120] sm:$0xff] %v643
        %1279 = vst [vmem:[%s188 + $0x128] sm:$0xff] %v645
        %1280 = vst [vmem:[%s188 + $0x130] sm:$0xff] %v756
        %1281 = vst [vmem:[%s188 + $0x138] sm:$0xff] %v758
        %1282 = vst [vmem:[%s188 + $0x140] sm:$0xff] %v869
        %1283 = vst [vmem:[%s188 + $0x148] sm:$0xff] %v871
        %1284 = vst [vmem:[%s188 + $0x150] sm:$0xff] %v982
        %1285 = vst [vmem:[%s188 + $0x158] sm:$0xff] %v984
        %1286 = vst [vmem:[%s188 + $0x160] sm:$0xff] %v1095
        %1287 = vst [vmem:[%s188 + $0x168] sm:$0xff] %v1097
        %1288 = vst [vmem:[%s188 + $0x170] sm:$0xff] %v1208
        %1289 = vst [vmem:[%s188 + $0x178] sm:$0xff] %v1210
        %1290 = vst [vmem:[%s188 + $0x180] sm:$0xff] %v423
        %1291 = vst [vmem:[%s188 + $0x188] sm:$0xff] %v425
        %1292 = vst [vmem:[%s188 + $0x190] sm:$0xff] %v536
        %1293 = vst [vmem:[%s188 + $0x198] sm:$0xff] %v538
        %1294 = vst [vmem:[%s188 + $0x1a0] sm:$0xff] %v649
        %1295 = vst [vmem:[%s188 + $0x1a8] sm:$0xff] %v651
        %1296 = vst [vmem:[%s188 + $0x1b0] sm:$0xff] %v762
        %1297 = vst [vmem:[%s188 + $0x1b8] sm:$0xff] %v764
        %1298 = vst [vmem:[%s188 + $0x1c0] sm:$0xff] %v875
        %1299 = vst [vmem:[%s188 + $0x1c8] sm:$0xff] %v877
        %1300 = vst [vmem:[%s188 + $0x1d0] sm:$0xff] %v988
        %1301 = vst [vmem:[%s188 + $0x1d8] sm:$0xff] %v990
        %1302 = vst [vmem:[%s188 + $0x1e0] sm:$0xff] %v1101
        %1303 = vst [vmem:[%s188 + $0x1e8] sm:$0xff] %v1103
        %1304 = vst [vmem:[%s188 + $0x1f0] sm:$0xff] %v1214
        %1305 = vst [vmem:[%s188 + $0x1f8] sm:$0xff] %v1216
        %1306 = vst [vmem:[%s188 + $0x200] sm:$0xff] %v429
        %1307 = vst [vmem:[%s188 + $0x208] sm:$0xff] %v431
        %1308 = vst [vmem:[%s188 + $0x210] sm:$0xff] %v542
        %1309 = vst [vmem:[%s188 + $0x218] sm:$0xff] %v544
        %1310 = vst [vmem:[%s188 + $0x220] sm:$0xff] %v655
        %1311 = vst [vmem:[%s188 + $0x228] sm:$0xff] %v657
        %1312 = vst [vmem:[%s188 + $0x230] sm:$0xff] %v768
        %1313 = vst [vmem:[%s188 + $0x238] sm:$0xff] %v770
        %1314 = vst [vmem:[%s188 + $0x240] sm:$0xff] %v881
        %1315 = vst [vmem:[%s188 + $0x248] sm:$0xff] %v883
        %1316 = vst [vmem:[%s188 + $0x250] sm:$0xff] %v994
        %1317 = vst [vmem:[%s188 + $0x258] sm:$0xff] %v996
        %1318 = vst [vmem:[%s188 + $0x260] sm:$0xff] %v1107
        %1319 = vst [vmem:[%s188 + $0x268] sm:$0xff] %v1109
        %1320 = vst [vmem:[%s188 + $0x270] sm:$0xff] %v1220
        %1321 = vst [vmem:[%s188 + $0x278] sm:$0xff] %v1222
        %1322 = vst [vmem:[%s188 + $0x280] sm:$0xff] %v435
        %1323 = vst [vmem:[%s188 + $0x288] sm:$0xff] %v437
        %1324 = vst [vmem:[%s188 + $0x290] sm:$0xff] %v548
        %1325 = vst [vmem:[%s188 + $0x298] sm:$0xff] %v550
        %1326 = vst [vmem:[%s188 + $0x2a0] sm:$0xff] %v661
        %1327 = vst [vmem:[%s188 + $0x2a8] sm:$0xff] %v663
        %1328 = vst [vmem:[%s188 + $0x2b0] sm:$0xff] %v774
        %1329 = vst [vmem:[%s188 + $0x2b8] sm:$0xff] %v776
        %1330 = vst [vmem:[%s188 + $0x2c0] sm:$0xff] %v887
        %1331 = vst [vmem:[%s188 + $0x2c8] sm:$0xff] %v889
        %1332 = vst [vmem:[%s188 + $0x2d0] sm:$0xff] %v1000
        %1333 = vst [vmem:[%s188 + $0x2d8] sm:$0xff] %v1002
        %1334 = vst [vmem:[%s188 + $0x2e0] sm:$0xff] %v1113
        %1335 = vst [vmem:[%s188 + $0x2e8] sm:$0xff] %v1115
        %1336 = vst [vmem:[%s188 + $0x2f0] sm:$0xff] %v1226
        %1337 = vst [vmem:[%s188 + $0x2f8] sm:$0xff] %v1228
        %1338 = vst [vmem:[%s188 + $0x300] sm:$0xff] %v441
        %1339 = vst [vmem:[%s188 + $0x308] sm:$0xff] %v443
        %1340 = vst [vmem:[%s188 + $0x310] sm:$0xff] %v554
        %1341 = vst [vmem:[%s188 + $0x318] sm:$0xff] %v556
        %1342 = vst [vmem:[%s188 + $0x320] sm:$0xff] %v667
        %1343 = vst [vmem:[%s188 + $0x328] sm:$0xff] %v669
        %1344 = vst [vmem:[%s188 + $0x330] sm:$0xff] %v780
        %1345 = vst [vmem:[%s188 + $0x338] sm:$0xff] %v782
        %1346 = vst [vmem:[%s188 + $0x340] sm:$0xff] %v893
        %1347 = vst [vmem:[%s188 + $0x348] sm:$0xff] %v895
        %1348 = vst [vmem:[%s188 + $0x350] sm:$0xff] %v1006
        %1349 = vst [vmem:[%s188 + $0x358] sm:$0xff] %v1008
        %1350 = vst [vmem:[%s188 + $0x360] sm:$0xff] %v1119
        %1351 = vst [vmem:[%s188 + $0x368] sm:$0xff] %v1121
        %1352 = vst [vmem:[%s188 + $0x370] sm:$0xff] %v1232
        %1353 = vst [vmem:[%s188 + $0x378] sm:$0xff] %v1234
        %1354 = vst [vmem:[%s188 + $0x380] sm:$0xff] %v447
        %1355 = vst [vmem:[%s188 + $0x388] sm:$0xff] %v449
        %1356 = vst [vmem:[%s188 + $0x390] sm:$0xff] %v560
        %1357 = vst [vmem:[%s188 + $0x398] sm:$0xff] %v562
        %1358 = vst [vmem:[%s188 + $0x3a0] sm:$0xff] %v673
        %1359 = vst [vmem:[%s188 + $0x3a8] sm:$0xff] %v675
        %1360 = vst [vmem:[%s188 + $0x3b0] sm:$0xff] %v786
        %1361 = vst [vmem:[%s188 + $0x3b8] sm:$0xff] %v788
        %1362 = vst [vmem:[%s188 + $0x3c0] sm:$0xff] %v899
        %1363 = vst [vmem:[%s188 + $0x3c8] sm:$0xff] %v901
        %1364 = vst [vmem:[%s188 + $0x3d0] sm:$0xff] %v1012
        %1365 = vst [vmem:[%s188 + $0x3d8] sm:$0xff] %v1014
        %1366 = vst [vmem:[%s188 + $0x3e0] sm:$0xff] %v1125
        %1367 = vst [vmem:[%s188 + $0x3e8] sm:$0xff] %v1127
        %1368 = vst [vmem:[%s188 + $0x3f0] sm:$0xff] %v1238
        %1369 = vst [vmem:[%s188 + $0x3f8] sm:$0xff] %v1240
        %s1370 = sand.u32 %s109, 1
        %s1371 = scalar_lea.sflag [#allocation3], %s1370
        %s1372 = sand.u32 %s109, 1
        %s1373 = smul.addr %s1372, 1024
        %s1374 = scalar_lea.vmem [#allocation2], %s1373
        // Predicated region
        $region33: #{tpu_custom_call.1} parent=31 // pred_check
          %p1375 = pneg %p119
        $region34: #{tpu_custom_call.1} parent=31 // pred_check_branch
          %1377 = sbr.rel (%p1375) target = $region36
        $region35: #{tpu_custom_call.1} parent=31 // pred_region
          %s1378 = smul.u32 16, %s22
          %s1380 = ssub.s32 16384, 16384
          %1381 = vsyncadd %s1371, %s1380
          %s1382 = smul.addr %s21, 256
          %s1383 = sadd.s32 %s1378, %s1382
          %s1384 = smul.addr %s1383, 128
          %s1385 = scalar_lea.hbm %s3, %s1384
          %s1386 = sshll.u32 %s1374, 4
          %s1387 = int_to_ptr.vmem [resolvable:$true] %s1386
          %1392 = dma.vmem_to_hbm [thread:$0]  %s1387, 16384, %s1385, %s1371, 2048, 4096, 128
        $region36: #{tpu_custom_call.1} parent=31 // pred_fallthru
          _
      $region32: #{tpu_custom_call.1} parent=5 // pred_fallthru
        _
      %p1393 = scmp.le.s32.totalorder 2, %s12
      // Predicated region
      $region37: #{tpu_custom_call.1} parent=5 // pred_check
        %p1394 = pneg %p1393
      $region38: #{tpu_custom_call.1} parent=5 // pred_check_branch
        %1396 = sbr.rel (%p1394) target = $region40
      $region39: #{tpu_custom_call.1} parent=5 // pred_region
        %s1397 = ssub.s32 %s12, 2
        // Predicated region
        $region41: #{tpu_custom_call.1} parent=39 // pred_check
          %p1398 = pneg %p125
        $region42: #{tpu_custom_call.1} parent=39 // pred_check_branch
          %1400 = sbr.rel (%p1398) target = $region44
        $region43: #{tpu_custom_call.1} parent=39 // pred_region
          %s1401 = sand.u32 %s110, 1
          %s1402 = scalar_lea.sflag [#allocation3], %s1401
          %s1403 = sand.u32 %s110, 1
          %s1404 = smul.addr %s1403, 1024
          %s1405 = scalar_lea.vmem [#allocation2], %s1404
          %1406 = dma.done %s1402, 16384
        $region44: #{tpu_custom_call.1} parent=39 // pred_fallthru
          _
      $region40: #{tpu_custom_call.1} parent=5 // pred_fallthru
        _
    $region6: #{tpu_custom_call.1} parent=1 // loop_footer
      %s16 = sadd.s32 1, %s12
    $region7: #{tpu_custom_call.1} parent=1 // loop_footer_branch
      %11 = sbr.rel target = $region3
    $region8: #{tpu_custom_call.1} parent=1 // loop_exit
      _
    %1407 = vsyncpa [#allocation3], 1
    %s1408 = scalar_lea.sflag [#allocation3], 1
    %1409 = vsyncpa %s1408, 1

</llo_original>
